<compile_context>
chip_gen: v7x
topology: tpu7x:2x2x1
jax: 0.10.0
libtpu: 0.0.40
codegen_flags: <defaults>
</compile_context>

<pallas_src>
import jax
import jax.numpy as jnp
from jax.experimental import pallas as pl
from jax.experimental.pallas import tpu as pltpu

_LANE = 128  # vreg lane width (last dim)


def _round_up(n, m):
    return ((n + m - 1) // m) * m


def _sublane(dtype):
    # dtype-aware sublane multiple: 8 for f32, 16 for bf16, 32 for int8/fp8.
    return max(8, 32 // jnp.dtype(dtype).itemsize)


def _vmem_budget():
    phys = 64 * 1024 * 1024  # conservative (v7x-sized) fallback
    try:
        info = pltpu.get_tpu_info()
        phys = int(getattr(info, "vmem_capacity_bytes", phys)) or phys
    except Exception:
        pass
    budget = int(phys * 0.75)   # what the tile chooser may plan to use
    limit = int(phys * 0.875)   # scoped limit handed to Mosaic (headroom left)
    return budget, limit


def mlp_kernel(x_ref, w1_ref, b1_ref, w2_ref, b2_ref, o_ref, acc_ref):
    k = pl.program_id(1)

    @pl.when(k == 0)
    def _init():
        acc_ref[...] = jnp.zeros_like(acc_ref)

    # fc1 chunk: [TM, In] @ [In, TH] -> f32 on the MXU.
    h = jnp.dot(x_ref[...], w1_ref[...], preferred_element_type=jnp.float32)
    # bias + ReLU (elementwise per hidden unit -> exact under H chunking).
    h = jnp.maximum(h + b1_ref[...], 0.0)
    # fc2 partial sum over this hidden chunk: [TM, TH] @ [TH, OutP].
    acc_ref[...] += jnp.dot(h.astype(w2_ref.dtype), w2_ref[...],
                            preferred_element_type=jnp.float32)

    @pl.when(k == pl.num_programs(1) - 1)
    def _finalize():
        o_ref[...] = (acc_ref[...] + b2_ref[...]).astype(o_ref.dtype)


def _choose_tiles(B, In, h_p, out_p, itemsize, budget, sub, tm_cap=1024):
    """Pick (TM, TH) so the real (double-buffered) allocation fits `budget`."""
    b_cap = _round_up(B, sub)

    # Megacore (v7x): keep >= 2 batch tiles when the batch is big enough so
    # the "parallel" axis can feed both TensorCores.  No-op for small B.
    tm_limit = min(tm_cap, b_cap)
    if B > 2 * _LANE:
        tm_limit = min(tm_limit, _round_up(-(-B // 2), _LANE))

    # TH candidates: multiples of 128 that divide h_p, largest first.
    # TH == h_p means a single k-step -> weights DMA'd exactly once overall.
    m = h_p // _LANE
    ths = sorted({_LANE * d for d in range(1, m + 1) if m % d == 0},
                 reverse=True)

    choice = None
    for th in ths:
        # Pipeline allocates 2 buffers per input/output block by default.
        fixed = 2 * (In * th + th + th * out_p + out_p) * itemsize
        per_row = (2 * In * itemsize          # x tile (double-buffered)
                   + 2 * out_p * itemsize     # out tile (double-buffered)
                   + out_p * 4                # f32 accumulator scratch
                   + th * (4 + itemsize))     # f32 h intermediate + cast copy
        avail = budget - fixed
        if avail <= 0:
            continue
        tm = avail // per_row
        if tm >= _LANE:
            tm = tm // _LANE * _LANE          # MXU-friendly M tile
        else:
            tm = tm // sub * sub
        tm = min(tm, tm_limit)
        if tm >= min(_LANE, tm_limit):
            choice = (int(tm), int(th))       # biggest TH with a decent TM
            break
        if choice is None and tm >= sub:
            choice = (int(tm), int(th))       # fallback: small TM, large TH
    if choice is None:
        # Pathologically large In/Out: smallest chunk, minimal batch tile.
        choice = (sub, ths[-1])
    return choice


def mlp_forward(x, w1_p, b1_p, w2_p, b2_p, out_features):
    """relu(x @ w1 + b1) @ w2 + b2 with H/Out already padded to 128-multiples."""
    B, In = x.shape
    h_p = w1_p.shape[1]
    out_p = w2_p.shape[1]
    dtype = x.dtype
    itemsize = jnp.dtype(dtype).itemsize
    sub = _sublane(dtype)
    budget, vmem_limit = _vmem_budget()

    tm, th = _choose_tiles(B, In, h_p, out_p, itemsize, budget, sub)

    grid_b = pl.cdiv(B, tm)
    grid_k = h_p // th
    b_pad = grid_b * tm
    x_in = x if b_pad == B else jnp.pad(x, ((0, b_pad - B), (0, 0)))

    flops = 2 * B * (In * h_p + h_p * out_p)
    bytes_accessed = int((x_in.size + w1_p.size + w2_p.size) * itemsize
                         + b_pad * out_p * itemsize)

    out_padded = pl.pallas_call(
        mlp_kernel,
        out_shape=jax.ShapeDtypeStruct((b_pad, out_p), dtype),
        grid=(grid_b, grid_k),
        in_specs=[
            pl.BlockSpec((tm, In), lambda i, k: (i, 0)),     # x (const over k)
            pl.BlockSpec((In, th), lambda i, k: (0, k)),     # w1 hidden chunk
            pl.BlockSpec((1, th), lambda i, k: (0, k)),      # b1 hidden chunk
            pl.BlockSpec((th, out_p), lambda i, k: (k, 0)),  # w2 hidden chunk
            pl.BlockSpec((1, out_p), lambda i, k: (0, 0)),   # b2 (constant)
        ],
        out_specs=pl.BlockSpec((tm, out_p), lambda i, k: (i, 0)),
        scratch_shapes=[pltpu.VMEM((tm, out_p), jnp.float32)],
        compiler_params=pltpu.CompilerParams(
            dimension_semantics=("parallel", "arbitrary"),
            vmem_limit_bytes=vmem_limit,
        ),
        cost_estimate=pl.CostEstimate(
            flops=flops, transcendentals=0, bytes_accessed=bytes_accessed),
    )(x_in, w1_p, b1_p, w2_p, b2_p)

    return out_padded[:B, :out_features]


class PallasMLP:
    """Mirror of the PyTorch MLP module (Linear -> ReLU -> Linear).

    Padding of the hidden/output feature dims to lane-dense 128-multiples is
    done ONCE here, not on every forward call (zero columns keep the math
    exact and are sliced off after the kernel).
    """

    def __init__(self, w1, b1, w2, b2):
        In, H = w1.shape
        Out = w2.shape[1]
        self.out_features = Out
        h_p = _round_up(H, _LANE)
        out_p = _round_up(Out, _LANE)
        self.w1 = jnp.pad(w1, ((0, 0), (0, h_p - H)))
        self.b1 = jnp.pad(b1.reshape(1, -1), ((0, 0), (0, h_p - H)))
        self.w2 = jnp.pad(w2, ((0, h_p - H), (0, out_p - Out)))
        self.b2 = jnp.pad(b2.reshape(1, -1), ((0, 0), (0, out_p - Out)))

    def __call__(self, x):
        return mlp_forward(x, self.w1, self.b1, self.w2, self.b2,
                           self.out_features)


def init_mlp_params(key, input_size, hidden_size, output_size,
                    dtype=jnp.float32):
    """PyTorch nn.Linear default init: U(-1/sqrt(fan_in), 1/sqrt(fan_in))."""
    k1, k2, k3, k4 = jax.random.split(key, 4)
    bound1 = 1.0 / (input_size ** 0.5)
    bound2 = 1.0 / (hidden_size ** 0.5)
    # Stored as [in_features, out_features] (transpose of PyTorch's [out, in]).
    w1 = jax.random.uniform(k1, (input_size, hidden_size), dtype, -bound1, bound1)
    b1 = jax.random.uniform(k2, (hidden_size,), dtype, -bound1, bound1)
    w2 = jax.random.uniform(k3, (hidden_size, output_size), dtype, -bound2, bound2)
    b2 = jax.random.uniform(k4, (output_size,), dtype, -bound2, bound2)
    return w1, b1, w2, b2


if __name__ == "__main__":
    key = jax.random.PRNGKey(0)
    k_params, k_x = jax.random.split(key)

    # Small demo shapes consistent with the PyTorch module (Linear->ReLU->Linear).
    batch = 8
    input_size = 16
    hidden_size = 32
    output_size = 4

    w1, b1, w2, b2 = init_mlp_params(k_params, input_size, hidden_size, output_size)
    x = jax.random.normal(k_x, (batch, input_size), dtype=jnp.float32)

    mlp = PallasMLP(w1, b1, w2, b2)
    out = jax.block_until_ready(mlp(x))

    # Pure-JAX reference (same math path, unpadded params).
    ref = jnp.maximum(x @ w1 + b1, 0.0) @ w2 + b2
    assert out.shape == (batch, output_size)
    assert jnp.allclose(out, ref, atol=1e-5, rtol=1e-5)

    print("KERNEL_OK")
</pallas_src>

<mosaic_0001>
module attributes {stable_mosaic.version = 11 : i64} {
  func.func @mlp_kernel(%arg0: i32, %arg1: i32, %arg2: memref<8x16xf32, #tpu.memory_space<vmem>>, %arg3: memref<16x128xf32, #tpu.memory_space<vmem>>, %arg4: memref<1x128xf32, #tpu.memory_space<vmem>>, %arg5: memref<128x128xf32, #tpu.memory_space<vmem>>, %arg6: memref<1x128xf32, #tpu.memory_space<vmem>>, %arg7: memref<8x128xf32, #tpu.memory_space<vmem>>, %arg8: memref<8x128xf32, #tpu.memory_space<vmem>>) attributes {dimension_semantics = [#tpu.dimension_semantics<parallel>, #tpu.dimension_semantics<arbitrary>], iteration_bounds = array<i64: 1, 1>, scalar_prefetch = 0 : i64, scratch_operands = 1 : i64, tpu.core_type = #tpu.core_type<tc>, window_params = [{transform_indices = @transform_0, window_bounds = array<i64: 8, 16>}, {transform_indices = @transform_1, window_bounds = array<i64: 16, 128>}, {transform_indices = @transform_2, window_bounds = array<i64: 1, 128>}, {transform_indices = @transform_3, window_bounds = array<i64: 128, 128>}, {pipeline_mode = #tpu.pipeline_mode<synchronous>, transform_indices = @transform_4, window_bounds = array<i64: 1, 128>}, {transform_indices = @transform_5, window_bounds = array<i64: 8, 128>}]} {
    %c0_i32 = arith.constant 0 : i32
    %0 = arith.cmpi eq, %arg1, %c0_i32 : i32
    %1 = arith.extui %0 : i1 to i32
    %c0_i32_0 = arith.constant 0 : i32
    %2 = arith.cmpi ne, %1, %c0_i32_0 : i32
    scf.if %2 {
      %cst_16 = arith.constant 0.000000e+00 : f32
      %19 = vector.broadcast %cst_16 : f32 to vector<8x128xf32>
      %c0_17 = arith.constant 0 : index
      %c0_18 = arith.constant 0 : index
      %20 = vector.load %arg8[%c0_17, %c0_18] : memref<8x128xf32, #tpu.memory_space<vmem>>, vector<8x128xf32>
      tpu.vector_store %arg8[%c0_17, %c0_18], %19 {strides = array<i32>} : memref<8x128xf32, #tpu.memory_space<vmem>>, vector<8x128xf32>,
    } else {
    }
    %c0 = arith.constant 0 : index
    %c0_1 = arith.constant 0 : index
    %3 = vector.load %arg2[%c0, %c0_1] : memref<8x16xf32, #tpu.memory_space<vmem>>, vector<8x16xf32>
    %c0_2 = arith.constant 0 : index
    %c0_3 = arith.constant 0 : index
    %4 = vector.load %arg3[%c0_2, %c0_3] : memref<16x128xf32, #tpu.memory_space<vmem>>, vector<16x128xf32>
    %cst = arith.constant dense<0.000000e+00> : vector<8x128xf32>
    %5 = tpu.matmul %3, %4, %cst {dimension_numbers = #tpu.dot_dimension_numbers<[1], [0], [0], [1], [0, 0, 1, 1], [], []>} : vector<8x16xf32>, vector<16x128xf32>, vector<8x128xf32> -> vector<8x128xf32>
    %c0_4 = arith.constant 0 : index
    %c0_5 = arith.constant 0 : index
    %6 = vector.load %arg4[%c0_4, %c0_5] : memref<1x128xf32, #tpu.memory_space<vmem>>, vector<1x128xf32>
    %7 = vector.broadcast %6 : vector<1x128xf32> to vector<8x128xf32>
    %8 = arith.addf %5, %7 : vector<8x128xf32>
    %cst_6 = arith.constant 0.000000e+00 : f32
    %9 = vector.broadcast %cst_6 : f32 to vector<8x128xf32>
    %10 = arith.maximumf %8, %9 : vector<8x128xf32>
    %c0_7 = arith.constant 0 : index
    %c0_8 = arith.constant 0 : index
    %11 = vector.load %arg8[%c0_7, %c0_8] : memref<8x128xf32, #tpu.memory_space<vmem>>, vector<8x128xf32>
    %c0_9 = arith.constant 0 : index
    %c0_10 = arith.constant 0 : index
    %12 = vector.load %arg5[%c0_9, %c0_10] : memref<128x128xf32, #tpu.memory_space<vmem>>, vector<128x128xf32>
    %cst_11 = arith.constant dense<0.000000e+00> : vector<8x128xf32>
    %13 = tpu.matmul %10, %12, %cst_11 {dimension_numbers = #tpu.dot_dimension_numbers<[1], [0], [0], [1], [0, 0, 1, 1], [], []>} : vector<8x128xf32>, vector<128x128xf32>, vector<8x128xf32> -> vector<8x128xf32>
    %14 = arith.addf %11, %13 : vector<8x128xf32>
    %c0_12 = arith.constant 0 : index
    %c0_13 = arith.constant 0 : index
    %15 = vector.load %arg8[%c0_12, %c0_13] : memref<8x128xf32, #tpu.memory_space<vmem>>, vector<8x128xf32>
    tpu.vector_store %arg8[%c0_12, %c0_13], %14 {strides = array<i32>} : memref<8x128xf32, #tpu.memory_space<vmem>>, vector<8x128xf32>,
    %c0_i32_14 = arith.constant 0 : i32
    %16 = arith.cmpi eq, %arg1, %c0_i32_14 : i32
    %17 = arith.extui %16 : i1 to i32
    %c0_i32_15 = arith.constant 0 : i32
    %18 = arith.cmpi ne, %17, %c0_i32_15 : i32
    scf.if %18 {
      %c0_16 = arith.constant 0 : index
      %c0_17 = arith.constant 0 : index
      %19 = vector.load %arg8[%c0_16, %c0_17] : memref<8x128xf32, #tpu.memory_space<vmem>>, vector<8x128xf32>
      %c0_18 = arith.constant 0 : index
      %c0_19 = arith.constant 0 : index
      %20 = vector.load %arg6[%c0_18, %c0_19] : memref<1x128xf32, #tpu.memory_space<vmem>>, vector<1x128xf32>
      %21 = vector.broadcast %20 : vector<1x128xf32> to vector<8x128xf32>
      %22 = arith.addf %19, %21 : vector<8x128xf32>
      %c0_20 = arith.constant 0 : index
      %c0_21 = arith.constant 0 : index
      %23 = vector.load %arg7[%c0_20, %c0_21] : memref<8x128xf32, #tpu.memory_space<vmem>>, vector<8x128xf32>
      tpu.vector_store %arg7[%c0_20, %c0_21], %22 {strides = array<i32>} : memref<8x128xf32, #tpu.memory_space<vmem>>, vector<8x128xf32>,
    } else {
    }
    return
  }
  func.func @transform_0(%arg0: i32, %arg1: i32) -> (i32, i32) {
    %c0_i32 = arith.constant 0 : i32
    %c0_i32_0 = arith.constant 0 : i32
    return %arg0, %c0_i32 : i32, i32
  }
  func.func @transform_1(%arg0: i32, %arg1: i32) -> (i32, i32) {
    %c0_i32 = arith.constant 0 : i32
    %c0_i32_0 = arith.constant 0 : i32
    return %c0_i32, %arg1 : i32, i32
  }
  func.func @transform_2(%arg0: i32, %arg1: i32) -> (i32, i32) {
    %c0_i32 = arith.constant 0 : i32
    %c0_i32_0 = arith.constant 0 : i32
    return %c0_i32, %arg1 : i32, i32
  }
  func.func @transform_3(%arg0: i32, %arg1: i32) -> (i32, i32) {
    %c0_i32 = arith.constant 0 : i32
    %c0_i32_0 = arith.constant 0 : i32
    return %arg1, %c0_i32 : i32, i32
  }
  func.func @transform_4(%arg0: i32, %arg1: i32) -> (i32, i32) {
    %c0_i32 = arith.constant 0 : i32
    %c0_i32_0 = arith.constant 0 : i32
    %c0_i32_1 = arith.constant 0 : i32
    return %c0_i32, %c0_i32_0 : i32, i32
  }
  func.func @transform_5(%arg0: i32, %arg1: i32) -> (i32, i32) {
    %c0_i32 = arith.constant 0 : i32
    %c0_i32_0 = arith.constant 0 : i32
    return %arg0, %c0_i32 : i32, i32
  }
}

</mosaic_0001>

<llo_original>
// kernel: tpu_custom_call.1
$region0: #{tpu_custom_call.1}
  #allocation0 [shape = 'u32[]', space=smem, size = 0x4, offset = 0x4, fixed_abs, tag = 'smem constant byte address 0x4 - core index']
  #allocation1 [shape = 'u32[144,128]{1,0:T(1,128)}', space=vmem, size = 0x12000, scoped, tag = 'internal scratch']
  #allocation2 [shape = 'f32[8,128]{1,0:T(8,128)}', space=vmem, size = 0x1000, scoped, tag = 'scratch operand']
  %s0 = inlined_call_operand.hbm [shape: f32[8,16], index: 0, kind: input, shape index: {}]
  %s1 = inlined_call_operand.hbm [shape: f32[16,128], index: 1, kind: input, shape index: {}]
  %s2 = inlined_call_operand.vmem [shape: f32[1,128], index: 2, kind: input, shape index: {}]
  %s3 = inlined_call_operand.hbm [shape: f32[128,128], index: 3, kind: input, shape index: {}]
  %s4 = inlined_call_operand.vmem [shape: f32[1,128], index: 4, kind: input, shape index: {}]
  %s5 = inlined_call_operand.hbm [shape: f32[8,128], index: 5, kind: output, shape index: {}]
  %s6 = sld [smem:[#allocation0]]
  $region50: #{tpu_custom_call.1} parent=0
    _
  %s8 = ssub.s32 1, %s6
  %s9 = scalar_select 0, %s8, %s6
  $region1: #{tpu_custom_call.1} parent=0
    #allocation3 [shape = 'u8[4096]{0}', space=vmem, size = 0x1000, scoped, tag = 'input window, operand 0, single buffered']
    #allocation4 [shape = 's32[1]{0}', space=sflag, size = 0x4, scoped, tag = 'scoped memory for tpu_custom_call.1']
    #allocation5 [shape = 's32[1]{0}', space=sflag, size = 0x4, scoped, tag = 'scoped memory for tpu_custom_call.1']
    #allocation6 [shape = 'u8[8192]{0}', space=vmem, size = 0x2000, scoped, tag = 'input window, operand 1, single buffered']
    #allocation7 [shape = 's32[1]{0}', space=sflag, size = 0x4, scoped, tag = 'scoped memory for tpu_custom_call.1']
    #allocation8 [shape = 'u8[65536]{0}', space=vmem, size = 0x10000, scoped, tag = 'input window, operand 3, single buffered']
    #allocation9 [shape = 'u8[4096]{0}', space=vmem, size = 0x1000, scoped, tag = 'output window, operand 0, single buffered']
    %10 = vsyncpa [#allocation4], 0
    %11 = vsyncpa [#allocation7], 0
    %12 = vsyncpa [#allocation5], 0
    // Predicated region
    $region2: #{tpu_custom_call.1} parent=1 // pred_check
      _
    $region3: #{tpu_custom_call.1} parent=1 // pred_check_branch
      %14 = sbr.rel (0) target = $region5
    $region4: #{tpu_custom_call.1} parent=1 // pred_region
      %s16 = ssub.s32 128, 128
      %17 = vsyncadd [#allocation4], %s16
      %s19 = sshll.u32 [#allocation3], 4
      %s20 = int_to_ptr.vmem [resolvable:$true] %s19
      %22 = dma.hbm_to_vmem [thread:$0]  %s0, 128, %s20, [#allocation4]
    $region5: #{tpu_custom_call.1} parent=1 // pred_fallthru
      _
    // Predicated region
    $region6: #{tpu_custom_call.1} parent=1 // pred_check
      _
    $region7: #{tpu_custom_call.1} parent=1 // pred_check_branch
      %24 = sbr.rel (0) target = $region9
    $region8: #{tpu_custom_call.1} parent=1 // pred_region
      %s26 = ssub.s32 256, 256
      %27 = vsyncadd [#allocation7], %s26
      %s28 = sshll.u32 [#allocation6], 4
      %s29 = int_to_ptr.vmem [resolvable:$true] %s28
      %34 = dma.hbm_to_vmem [thread:$0]  %s1, 256, %s29, [#allocation7], 128, 128, 8
    $region9: #{tpu_custom_call.1} parent=1 // pred_fallthru
      _
    // Predicated region
    $region10: #{tpu_custom_call.1} parent=1 // pred_check
      _
    $region11: #{tpu_custom_call.1} parent=1 // pred_check_branch
      %36 = sbr.rel (0) target = $region13
    $region12: #{tpu_custom_call.1} parent=1 // pred_region
      _
    $region13: #{tpu_custom_call.1} parent=1 // pred_fallthru
      _
    // Predicated region
    $region14: #{tpu_custom_call.1} parent=1 // pred_check
      _
    $region15: #{tpu_custom_call.1} parent=1 // pred_check_branch
      %38 = sbr.rel (0) target = $region17
    $region16: #{tpu_custom_call.1} parent=1 // pred_region
      %s40 = ssub.s32 2048, 2048
      %41 = vsyncadd [#allocation7], %s40
      %s42 = sshll.u32 [#allocation8], 4
      %s43 = int_to_ptr.vmem [resolvable:$true] %s42
      %48 = dma.hbm_to_vmem [thread:$0]  %s3, 2048, %s43, [#allocation7], 128, 128, 8
    $region17: #{tpu_custom_call.1} parent=1 // pred_fallthru
      _
    // Predicated region
    $region18: #{tpu_custom_call.1} parent=1 // pred_check
      _
    $region19: #{tpu_custom_call.1} parent=1 // pred_check_branch
      %50 = sbr.rel (0) target = $region21
    $region20: #{tpu_custom_call.1} parent=1 // pred_region
      _
    $region21: #{tpu_custom_call.1} parent=1 // pred_fallthru
      _
    // Predicated region
    $region22: #{tpu_custom_call.1} parent=1 // pred_check
      _
    $region23: #{tpu_custom_call.1} parent=1 // pred_check_branch
      %52 = sbr.rel (0) target = $region25
    $region24: #{tpu_custom_call.1} parent=1 // pred_region
      %53 = dma.done [#allocation4], 128
    $region25: #{tpu_custom_call.1} parent=1 // pred_fallthru
      _
    // Predicated region
    $region26: #{tpu_custom_call.1} parent=1 // pred_check
      _
    $region27: #{tpu_custom_call.1} parent=1 // pred_check_branch
      %55 = sbr.rel (0) target = $region29
    $region28: #{tpu_custom_call.1} parent=1 // pred_region
      %56 = dma.done [#allocation7], 256
    $region29: #{tpu_custom_call.1} parent=1 // pred_fallthru
      _
    // Predicated region
    $region30: #{tpu_custom_call.1} parent=1 // pred_check
      _
    $region31: #{tpu_custom_call.1} parent=1 // pred_check_branch
      %58 = sbr.rel (0) target = $region33
    $region32: #{tpu_custom_call.1} parent=1 // pred_region
      %59 = dma.done [#allocation7], 2048
    $region33: #{tpu_custom_call.1} parent=1 // pred_fallthru
      _
    %p60 = scmp.eq.s32.totalorder 0, 0
    // Predicated region
    $region34: #{tpu_custom_call.1} parent=1 // pred_check
      %p61 = pneg %p60
    $region35: #{tpu_custom_call.1} parent=1 // pred_check_branch
      %63 = sbr.rel (%p61) target = $region37
    $region36: #{tpu_custom_call.1} parent=1 // pred_region
      %64 = vst [vmem:[#allocation2] sm:$0xff] 0.0
    $region37: #{tpu_custom_call.1} parent=1 // pred_fallthru
      _
    %v65 = vld [vmem:[#allocation3] sm:$0xff]
    %v66 = vld [vmem:[#allocation6] sm:$0xff]
    %v67 = vld [vmem:[#allocation6 + $0x8] sm:$0xff]
    %v68 = vld [vmem:[%s2] sm:$0x1]
    %v70 = vlaneseq
    %v71 = vshrl.u32 %v70, 7
    %v72 = vsub.s32 0, %v71
    %v73 = vrot.slane %v68, %v72
    %vm75 = vcmask 130048
    %v77 = vsel %vm75, %v65, 0
    %79 = vmatprep.subr.mxu0 0.0
    %80 = vmatpush1.msra.mxu0 %v66
    %81 = vmatprep.subr.mxu0 0.0
    %82 = vmatpush1.msra.mxu0 %v67
    %83 = vmatprep.subr.mxu0 0.0
    %84 = vmatpush1.msra.mxu0 0.0
    %85 = vmatprep.subr.mxu0 0.0
    %86 = vmatpush1.msra.mxu0 0.0
    %87 = vmatprep.subr.mxu0 0.0
    %88 = vmatpush1.msra.mxu0 0.0
    %89 = vmatprep.subr.mxu0 0.0
    %90 = vmatpush1.msra.mxu0 0.0
    %91 = vmatprep.subr.mxu0 0.0
    %92 = vmatpush1.msra.mxu0 0.0
    %93 = vmatprep.subr.mxu0 0.0
    %94 = vmatpush1.msra.mxu0 0.0
    %95 = vmatprep.subr.mxu0 0.0
    %96 = vmatpush1.msra.mxu0 0.0
    %97 = vmatprep.subr.mxu0 0.0
    %98 = vmatpush1.msra.mxu0 0.0
    %99 = vmatprep.subr.mxu0 0.0
    %100 = vmatpush1.msra.mxu0 0.0
    %101 = vmatprep.subr.mxu0 0.0
    %102 = vmatpush1.msra.mxu0 0.0
    %103 = vmatprep.subr.mxu0 0.0
    %104 = vmatpush1.msra.mxu0 0.0
    %105 = vmatprep.subr.mxu0 0.0
    %106 = vmatpush1.msra.mxu0 0.0
    %107 = vmatprep.subr.mxu0 0.0
    %108 = vmatpush1.msra.mxu0 0.0
    %109 = vmatprep.subr.mxu0 0.0
    %110 = vmatpush1.msra.mxu0 0.0
    %111 = vmatprep.subr.mxu0 0.0
    %112 = vmatpush1.msra.mxu0 0.0
    %113 = vmatprep.subr.mxu0 0.0
    %114 = vmatpush1.msra.mxu0 0.0
    %115 = vmatprep.subr.mxu0 0.0
    %116 = vmatpush1.msra.mxu0 0.0
    %117 = vmatprep.subr.mxu0 0.0
    %118 = vmatpush1.msra.mxu0 0.0
    %119 = vmatprep.subr.mxu0 0.0
    %120 = vmatpush1.msra.mxu0 0.0
    %121 = vmatprep.subr.mxu0 0.0
    %122 = vmatpush1.msra.mxu0 0.0
    %123 = vmatprep.subr.mxu0 0.0
    %124 = vmatpush1.msra.mxu0 0.0
    %125 = vmatprep.subr.mxu0 0.0
    %126 = vmatpush1.msra.mxu0 0.0
    %127 = vmatprep.subr.mxu0 0.0
    %128 = vmatpush1.msra.mxu0 0.0
    %129 = vmatprep.subr.mxu0 0.0
    %130 = vmatpush1.msra.mxu0 0.0
    %131 = vmatprep.subr.mxu0 0.0
    %132 = vmatpush1.msra.mxu0 0.0
    %133 = vmatprep.subr.mxu0 0.0
    %134 = vmatpush1.msra.mxu0 0.0
    %135 = vmatprep.subr.mxu0 0.0
    %136 = vmatpush1.msra.mxu0 0.0
    %137 = vmatprep.subr.mxu0 0.0
    %138 = vmatpush1.msra.mxu0 0.0
    %139 = vmatprep.subr.mxu0 0.0
    %140 = vmatpush1.msra.mxu0 0.0
    %141 = vmatprep.subr.mxu0 0.0
    %142 = vmatpush1.msra.mxu0 0.0
    %143 = vmatprep.mubr.f32.mxu0 0.0
    %144 = vmatmul.mubr.f32.gmra.mrb[0].mxu0 %v77
    %v145 = vpop.f32.mrb[0].mxu0
    %v146 = vadd.f32 %v73, %v145
    %v147 = vpop.f32.mrb[0].mxu0
    %148 = vdwg.mxu0
    %v149 = vmax.f32 %v146, 0.0
    %v150 = vld [vmem:[#allocation2] sm:$0xff]
    %v151 = vld [vmem:[#allocation8] sm:$0xff]
    %v152 = vld [vmem:[#allocation8 + $0x8] sm:$0xff]
    %v153 = vld [vmem:[#allocation8 + $0x10] sm:$0xff]
    %v154 = vld [vmem:[#allocation8 + $0x18] sm:$0xff]
    %v155 = vld [vmem:[#allocation8 + $0x20] sm:$0xff]
    %v156 = vld [vmem:[#allocation8 + $0x28] sm:$0xff]
    %v157 = vld [vmem:[#allocation8 + $0x30] sm:$0xff]
    %v158 = vld [vmem:[#allocation8 + $0x38] sm:$0xff]
    %v159 = vld [vmem:[#allocation8 + $0x40] sm:$0xff]
    %v160 = vld [vmem:[#allocation8 + $0x48] sm:$0xff]
    %v161 = vld [vmem:[#allocation8 + $0x50] sm:$0xff]
    %v162 = vld [vmem:[#allocation8 + $0x58] sm:$0xff]
    %v163 = vld [vmem:[#allocation8 + $0x60] sm:$0xff]
    %v164 = vld [vmem:[#allocation8 + $0x68] sm:$0xff]
    %v165 = vld [vmem:[#allocation8 + $0x70] sm:$0xff]
    %v166 = vld [vmem:[#allocation8 + $0x78] sm:$0xff]
    %167 = vmatprep.subr.mxu0 0.0
    %168 = vmatpush1.msra.mxu0 %v151
    %169 = vmatprep.subr.mxu0 0.0
    %170 = vmatpush1.msra.mxu0 %v152
    %171 = vmatprep.subr.mxu0 0.0
    %172 = vmatpush1.msra.mxu0 %v153
    %173 = vmatprep.subr.mxu0 0.0
    %174 = vmatpush1.msra.mxu0 %v154
    %175 = vmatprep.subr.mxu0 0.0
    %176 = vmatpush1.msra.mxu0 %v155
    %177 = vmatprep.subr.mxu0 0.0
    %178 = vmatpush1.msra.mxu0 %v156
    %179 = vmatprep.subr.mxu0 0.0
    %180 = vmatpush1.msra.mxu0 %v157
    %181 = vmatprep.subr.mxu0 0.0
    %182 = vmatpush1.msra.mxu0 %v158
    %183 = vmatprep.subr.mxu0 0.0
    %184 = vmatpush1.msra.mxu0 %v159
    %185 = vmatprep.subr.mxu0 0.0
    %186 = vmatpush1.msra.mxu0 %v160
    %187 = vmatprep.subr.mxu0 0.0
    %188 = vmatpush1.msra.mxu0 %v161
    %189 = vmatprep.subr.mxu0 0.0
    %190 = vmatpush1.msra.mxu0 %v162
    %191 = vmatprep.subr.mxu0 0.0
    %192 = vmatpush1.msra.mxu0 %v163
    %193 = vmatprep.subr.mxu0 0.0
    %194 = vmatpush1.msra.mxu0 %v164
    %195 = vmatprep.subr.mxu0 0.0
    %196 = vmatpush1.msra.mxu0 %v165
    %197 = vmatprep.subr.mxu0 0.0
    %198 = vmatpush1.msra.mxu0 %v166
    %199 = vmatprep.subr.mxu0 0.0
    %200 = vmatpush1.msra.mxu0 0.0
    %201 = vmatprep.subr.mxu0 0.0
    %202 = vmatpush1.msra.mxu0 0.0
    %203 = vmatprep.subr.mxu0 0.0
    %204 = vmatpush1.msra.mxu0 0.0
    %205 = vmatprep.subr.mxu0 0.0
    %206 = vmatpush1.msra.mxu0 0.0
    %207 = vmatprep.subr.mxu0 0.0
    %208 = vmatpush1.msra.mxu0 0.0
    %209 = vmatprep.subr.mxu0 0.0
    %210 = vmatpush1.msra.mxu0 0.0
    %211 = vmatprep.subr.mxu0 0.0
    %212 = vmatpush1.msra.mxu0 0.0
    %213 = vmatprep.subr.mxu0 0.0
    %214 = vmatpush1.msra.mxu0 0.0
    %215 = vmatprep.subr.mxu0 0.0
    %216 = vmatpush1.msra.mxu0 0.0
    %217 = vmatprep.subr.mxu0 0.0
    %218 = vmatpush1.msra.mxu0 0.0
    %219 = vmatprep.subr.mxu0 0.0
    %220 = vmatpush1.msra.mxu0 0.0
    %221 = vmatprep.subr.mxu0 0.0
    %222 = vmatpush1.msra.mxu0 0.0
    %223 = vmatprep.subr.mxu0 0.0
    %224 = vmatpush1.msra.mxu0 0.0
    %225 = vmatprep.subr.mxu0 0.0
    %226 = vmatpush1.msra.mxu0 0.0
    %227 = vmatprep.subr.mxu0 0.0
    %228 = vmatpush1.msra.mxu0 0.0
    %229 = vmatprep.subr.mxu0 0.0
    %230 = vmatpush1.msra.mxu0 0.0
    %231 = vmatprep.mubr.f32.mxu0 0.0
    %232 = vmatmul.mubr.f32.gmra.mrb[0].mxu0 %v149
    %v233 = vpop.f32.mrb[0].mxu0
    %v234 = vadd.f32 0.0, %v233
    %v235 = vpop.f32.mrb[0].mxu0
    %236 = vdwg.mxu0
    %v237 = vadd.f32 %v150, %v234
    %238 = vst [vmem:[#allocation2] sm:$0xff] %v237
    // Predicated region
    $region38: #{tpu_custom_call.1} parent=1 // pred_check
      %p239 = pneg %p60
    $region39: #{tpu_custom_call.1} parent=1 // pred_check_branch
      %241 = sbr.rel (%p239) target = $region41
    $region40: #{tpu_custom_call.1} parent=1 // pred_region
      %v242 = vld [vmem:[#allocation2] sm:$0xff]
      %v243 = vld [vmem:[%s4] sm:$0x1]
      %v245 = vlaneseq
      %v246 = vshrl.u32 %v245, 7
      %v247 = vsub.s32 0, %v246
      %v248 = vrot.slane %v243, %v247
      %v250 = vadd.f32 %v242, %v248
      %251 = vst [vmem:[#allocation9] sm:$0xff] %v250
    $region41: #{tpu_custom_call.1} parent=1 // pred_fallthru
      _
    // Predicated region
    $region42: #{tpu_custom_call.1} parent=1 // pred_check
      _
    $region43: #{tpu_custom_call.1} parent=1 // pred_check_branch
      %253 = sbr.rel (0) target = $region45
    $region44: #{tpu_custom_call.1} parent=1 // pred_region
      %s255 = ssub.s32 128, 128
      %256 = vsyncadd [#allocation5], %s255
      %s258 = sshll.u32 [#allocation9], 4
      %s259 = int_to_ptr.vmem [resolvable:$true] %s258
      %261 = dma.vmem_to_hbm [thread:$0]  %s259, 128, %s5, [#allocation5]
    $region45: #{tpu_custom_call.1} parent=1 // pred_fallthru
      _
    // Predicated region
    $region46: #{tpu_custom_call.1} parent=1 // pred_check
      _
    $region47: #{tpu_custom_call.1} parent=1 // pred_check_branch
      %263 = sbr.rel (0) target = $region49
    $region48: #{tpu_custom_call.1} parent=1 // pred_region
      %264 = dma.done [#allocation5], 128
    $region49: #{tpu_custom_call.1} parent=1 // pred_fallthru
      _
    %265 = vsyncpa [#allocation4], 1
    %266 = vsyncpa [#allocation7], 1
    %267 = vsyncpa [#allocation5], 1

</llo_original>
